<compile_context>
chip_gen: v6e
topology: v6e:2x2x1
jax: 0.10.0
libtpu: 0.0.40
codegen_flags: <defaults>
</compile_context>

<pallas_src>
import functools

import jax
import jax.numpy as jnp
from jax import lax
from jax.experimental import pallas as pl
from jax.experimental.pallas import tpu as pltpu


def swiglu_kernel(x_ref, wg_ref, wu_ref, wd_ref, o_ref, acc_ref):
    # x_ref:   (tm, E)  activations tile (resident across the k axis)
    # wg_ref:  (E, tk)  gate_proj weight slice (pre-transposed, NN layout)
    # wu_ref:  (E, tk)  up_proj   weight slice (pre-transposed, NN layout)
    # wd_ref:  (tk, E)  down_proj weight slice (pre-transposed, NN layout)
    # o_ref:   (tm, E)  output tile
    # acc_ref: (tm, E)  f32 accumulator (VMEM scratch), resident across k
    k = pl.program_id(1)

    @pl.when(k == 0)
    def _():
        acc_ref[...] = jnp.zeros_like(acc_ref)

    x = x_ref[...]
    # (tm, E) x (E, tk) -> (tm, tk), f32 accumulation on the MXU.
    gate = jnp.dot(x, wg_ref[...], preferred_element_type=jnp.float32)
    up = jnp.dot(x, wu_ref[...], preferred_element_type=jnp.float32)
    # SiLU(gate) * up in f32 (VPU + EUP).
    h = (gate * jax.nn.sigmoid(gate)) * up
    # Down projection partial sum: (tm, tk) x (tk, E) -> (tm, E).
    acc_ref[...] += jnp.dot(h.astype(wd_ref.dtype), wd_ref[...],
                            preferred_element_type=jnp.float32)

    @pl.when(k == pl.num_programs(1) - 1)
    def _():
        o_ref[...] = acc_ref[...].astype(o_ref.dtype)


def prepare_swiglu_params(wg_KE, wu_KE, wd_EK):
    """One-time conversion of PyTorch nn.Linear weights ([out, in]) to the
    MXU-friendly NN orientation the kernel consumes.  Call this once at
    parameter-load time (outside jit); the cost is amortized over all forward
    calls and guarantees no per-step transposes inside the kernel."""
    wg_EK = jnp.transpose(wg_KE)   # (E, K)
    wu_EK = jnp.transpose(wu_KE)   # (E, K)
    wd_KE = jnp.transpose(wd_EK)   # (K, E)
    return wg_EK, wu_EK, wd_KE


# generation: (tm_target, tk_target, tensorcores_per_chip)
_TILE_TARGETS = {
    "v7x": (512, 256, 2),
    "v6e": (1024, 512, 1),
    "v5e": (512, 512, 1),
    "unknown": (512, 512, 1),
}


def _tpu_generation():
    try:
        kind = jax.devices()[0].device_kind.lower()
    except Exception:  # pragma: no cover
        return "unknown"
    if "v7" in kind:
        return "v7x"
    if "v6" in kind:
        return "v6e"
    if "v5" in kind:
        return "v5e"
    return "unknown"


def _choose_tile(dim, target, min_mult):
    """Largest tile <= target that divides dim, preferring MXU-aligned
    multiples of 128, then `min_mult`-aligned tiles; falls back to the full
    dim (a full-extent block is always legal, even when unaligned)."""
    target = max(min(target, dim), 1)
    for mult in (128, min_mult):
        t = (target // mult) * mult
        while t >= mult:
            if dim % t == 0:
                return t
            t -= mult
    return dim


def _vmem_limit_bytes(gen):
    # ~8 MiB headroom below physical VMEM (128 MiB v5e/v6e, 64 MiB v7x).
    try:
        cap = int(pltpu.get_tpu_info().vmem_capacity_bytes)
        return max(32 << 20, cap - (8 << 20))
    except Exception:  # pragma: no cover - info query unavailable
        return (56 << 20) if gen == "v7x" else (116 << 20)


@functools.partial(jax.jit, static_argnames=("tm", "tk"))
def swiglu(x_BTE, wg_EK, wu_EK, wd_KE, *, tm=None, tk=None):
    """SwiGLU forward.  Weights must be pre-transposed once with
    `prepare_swiglu_params` (parameter-load time)."""
    B, T, E = x_BTE.shape
    E_w, K = wg_EK.shape
    assert E_w == E and wu_EK.shape == (E, K) and wd_KE.shape == (K, E)
    M = B * T

    gen = _tpu_generation()
    tm_target, tk_target, n_cores = _TILE_TARGETS[gen]

    x_ME = x_BTE.reshape(M, E)
    # Match matmul operand dtypes (feed bf16 weights for peak MXU rate on all
    # generations; v5e in particular runs f32 matmuls far below peak).
    w_dtype = wg_EK.dtype
    if x_ME.dtype != w_dtype:
        x_ME = x_ME.astype(w_dtype)

    # Sublane granularity for the row tile (8 for f32, 16 for bf16, ...).
    sublane = max(8, (32 // (jnp.dtype(w_dtype).itemsize * 8)) * 8)

    # --- tile selection ------------------------------------------------------
    if tm is None:
        tm = _choose_tile(M, tm_target, sublane)
        # Only on 2-TensorCore chips (v7x): make sure the parallel M axis has
        # at least one step per core.  Never applied on single-TC v5e/v6e,
        # where it would only halve weight-reuse arithmetic intensity.
        if n_cores > 1 and M // tm < n_cores:
            half = tm // 2
            if half >= 128 and half % 128 == 0 and M % half == 0:
                tm = half
    if tk is None:
        tk = _choose_tile(K, tk_target, 128)
    assert M % tm == 0, "B*T must be divisible by the row tile"
    assert K % tk == 0, "d_hid must be divisible by the hidden tile"

    grid = (M // tm, K // tk)
    isz = jnp.dtype(x_ME.dtype).itemsize
    wsz = jnp.dtype(w_dtype).itemsize
    cost = pl.CostEstimate(
        flops=6 * M * E * K,
        transcendentals=M * K,
        # Weights are re-streamed from HBM once per M tile.
        bytes_accessed=(M // tm) * 3 * E * K * wsz + 2 * M * E * isz,
    )

    out_ME = pl.pallas_call(
        swiglu_kernel,
        out_shape=jax.ShapeDtypeStruct((M, E), x_BTE.dtype),
        grid_spec=pltpu.PrefetchScalarGridSpec(
            num_scalar_prefetch=0,
            grid=grid,
            in_specs=[
                pl.BlockSpec((tm, E), lambda i, k: (i, 0)),   # x (resident over k)
                pl.BlockSpec((E, tk), lambda i, k: (0, k)),   # gate_proj slice
                pl.BlockSpec((E, tk), lambda i, k: (0, k)),   # up_proj slice
                pl.BlockSpec((tk, E), lambda i, k: (k, 0)),   # down_proj slice
            ],
            out_specs=pl.BlockSpec((tm, E), lambda i, k: (i, 0)),
            scratch_shapes=[pltpu.VMEM((tm, E), jnp.float32)],
        ),
        compiler_params=pltpu.CompilerParams(
            dimension_semantics=("parallel", "arbitrary"),
            vmem_limit_bytes=_vmem_limit_bytes(gen),
        ),
        cost_estimate=cost,
    )(x_ME, wg_EK, wu_EK, wd_KE)

    return out_ME.reshape(B, T, E)


def swiglu_reference(x_BTE, wg_KE, wu_KE, wd_EK):
    # Reference in the original PyTorch weight layout ([out, in]).
    gate = jnp.einsum("bte,ke->btk", x_BTE, wg_KE,
                      precision=lax.Precision.HIGHEST)
    up = jnp.einsum("bte,ke->btk", x_BTE, wu_KE,
                    precision=lax.Precision.HIGHEST)
    h = jax.nn.silu(gate) * up
    return jnp.einsum("btk,ek->bte", h, wd_EK,
                      precision=lax.Precision.HIGHEST)


if __name__ == "__main__":
    # Small but tile-friendly shapes: B=2, T=64, d_embd=128, d_hid=256.
    B, T, E, K = 2, 64, 128, 256
    key = jax.random.PRNGKey(0)
    kx, kg, ku, kd = jax.random.split(key, 4)

    x_BTE = jax.random.normal(kx, (B, T, E), dtype=jnp.float32)
    # Weights in PyTorch nn.Linear convention: [out_features, in_features].
    wg_KE = jax.random.normal(kg, (K, E), dtype=jnp.float32) * (E ** -0.5)
    wu_KE = jax.random.normal(ku, (K, E), dtype=jnp.float32) * (E ** -0.5)
    wd_EK = jax.random.normal(kd, (E, K), dtype=jnp.float32) * (K ** -0.5)

    # One-time, parameter-load-time layout conversion (amortized over calls).
    wg_EK, wu_EK, wd_KE = prepare_swiglu_params(wg_KE, wu_KE, wd_EK)

    out = swiglu(x_BTE, wg_EK, wu_EK, wd_KE)
    jax.block_until_ready(out)

    ref = swiglu_reference(x_BTE, wg_KE, wu_KE, wd_EK)
    assert out.shape == (B, T, E)
    assert jnp.allclose(out, ref, atol=1e-4, rtol=1e-4), float(
        jnp.max(jnp.abs(out - ref)))

    print("KERNEL_OK")
</pallas_src>

<mosaic_0001>
module attributes {stable_mosaic.version = 11 : i64} {
  func.func @swiglu_kernel(%arg0: i32, %arg1: i32, %arg2: memref<128x128xf32, #tpu.memory_space<vmem>>, %arg3: memref<128x256xf32, #tpu.memory_space<vmem>>, %arg4: memref<128x256xf32, #tpu.memory_space<vmem>>, %arg5: memref<256x128xf32, #tpu.memory_space<vmem>>, %arg6: memref<128x128xf32, #tpu.memory_space<vmem>>, %arg7: memref<128x128xf32, #tpu.memory_space<vmem>>) attributes {dimension_semantics = [#tpu.dimension_semantics<parallel>, #tpu.dimension_semantics<arbitrary>], iteration_bounds = array<i64: 1, 1>, scalar_prefetch = 0 : i64, scratch_operands = 1 : i64, tpu.core_type = #tpu.core_type<tc>, window_params = [{transform_indices = @transform_0, window_bounds = array<i64: 128, 128>}, {transform_indices = @transform_1, window_bounds = array<i64: 128, 256>}, {transform_indices = @transform_2, window_bounds = array<i64: 128, 256>}, {transform_indices = @transform_3, window_bounds = array<i64: 256, 128>}, {transform_indices = @transform_4, window_bounds = array<i64: 128, 128>}]} {
    %c0_i32 = arith.constant 0 : i32
    %0 = arith.cmpi eq, %arg1, %c0_i32 : i32
    %1 = arith.extui %0 : i1 to i32
    %c0_i32_0 = arith.constant 0 : i32
    %2 = arith.cmpi ne, %1, %c0_i32_0 : i32
    scf.if %2 {
      %cst_17 = arith.constant 0.000000e+00 : f32
      %23 = vector.broadcast %cst_17 : f32 to vector<128x128xf32>
      %c0_18 = arith.constant 0 : index
      %c0_19 = arith.constant 0 : index
      %24 = vector.load %arg7[%c0_18, %c0_19] : memref<128x128xf32, #tpu.memory_space<vmem>>, vector<128x128xf32>
      tpu.vector_store %arg7[%c0_18, %c0_19], %23 {strides = array<i32>} : memref<128x128xf32, #tpu.memory_space<vmem>>, vector<128x128xf32>,
    } else {
    }
    %c0 = arith.constant 0 : index
    %c0_1 = arith.constant 0 : index
    %3 = vector.load %arg2[%c0, %c0_1] : memref<128x128xf32, #tpu.memory_space<vmem>>, vector<128x128xf32>
    %c0_2 = arith.constant 0 : index
    %c0_3 = arith.constant 0 : index
    %4 = vector.load %arg3[%c0_2, %c0_3] : memref<128x256xf32, #tpu.memory_space<vmem>>, vector<128x256xf32>
    %cst = arith.constant dense<0.000000e+00> : vector<128x256xf32>
    %5 = tpu.matmul %3, %4, %cst {dimension_numbers = #tpu.dot_dimension_numbers<[1], [0], [0], [1], [0, 0, 1, 1], [], []>} : vector<128x128xf32>, vector<128x256xf32>, vector<128x256xf32> -> vector<128x256xf32>
    %c0_4 = arith.constant 0 : index
    %c0_5 = arith.constant 0 : index
    %6 = vector.load %arg4[%c0_4, %c0_5] : memref<128x256xf32, #tpu.memory_space<vmem>>, vector<128x256xf32>
    %cst_6 = arith.constant dense<0.000000e+00> : vector<128x256xf32>
    %7 = tpu.matmul %3, %6, %cst_6 {dimension_numbers = #tpu.dot_dimension_numbers<[1], [0], [0], [1], [0, 0, 1, 1], [], []>} : vector<128x128xf32>, vector<128x256xf32>, vector<128x256xf32> -> vector<128x256xf32>
    %8 = arith.negf %5 : vector<128x256xf32>
    %9 = math.exp %8 : vector<128x256xf32>
    %cst_7 = arith.constant 1.000000e+00 : f32
    %10 = vector.broadcast %cst_7 : f32 to vector<128x256xf32>
    %11 = arith.addf %10, %9 : vector<128x256xf32>
    %12 = arith.divf %10, %11 : vector<128x256xf32>
    %13 = arith.mulf %5, %12 : vector<128x256xf32>
    %14 = arith.mulf %13, %7 : vector<128x256xf32>
    %c0_8 = arith.constant 0 : index
    %c0_9 = arith.constant 0 : index
    %15 = vector.load %arg7[%c0_8, %c0_9] : memref<128x128xf32, #tpu.memory_space<vmem>>, vector<128x128xf32>
    %c0_10 = arith.constant 0 : index
    %c0_11 = arith.constant 0 : index
    %16 = vector.load %arg5[%c0_10, %c0_11] : memref<256x128xf32, #tpu.memory_space<vmem>>, vector<256x128xf32>
    %cst_12 = arith.constant dense<0.000000e+00> : vector<128x128xf32>
    %17 = tpu.matmul %14, %16, %cst_12 {dimension_numbers = #tpu.dot_dimension_numbers<[1], [0], [0], [1], [0, 0, 1, 1], [], []>} : vector<128x256xf32>, vector<256x128xf32>, vector<128x128xf32> -> vector<128x128xf32>
    %18 = arith.addf %15, %17 : vector<128x128xf32>
    %c0_13 = arith.constant 0 : index
    %c0_14 = arith.constant 0 : index
    %19 = vector.load %arg7[%c0_13, %c0_14] : memref<128x128xf32, #tpu.memory_space<vmem>>, vector<128x128xf32>
    tpu.vector_store %arg7[%c0_13, %c0_14], %18 {strides = array<i32>} : memref<128x128xf32, #tpu.memory_space<vmem>>, vector<128x128xf32>,
    %c0_i32_15 = arith.constant 0 : i32
    %20 = arith.cmpi eq, %arg1, %c0_i32_15 : i32
    %21 = arith.extui %20 : i1 to i32
    %c0_i32_16 = arith.constant 0 : i32
    %22 = arith.cmpi ne, %21, %c0_i32_16 : i32
    scf.if %22 {
      %c0_17 = arith.constant 0 : index
      %c0_18 = arith.constant 0 : index
      %23 = vector.load %arg7[%c0_17, %c0_18] : memref<128x128xf32, #tpu.memory_space<vmem>>, vector<128x128xf32>
      %c0_19 = arith.constant 0 : index
      %c0_20 = arith.constant 0 : index
      %24 = vector.load %arg6[%c0_19, %c0_20] : memref<128x128xf32, #tpu.memory_space<vmem>>, vector<128x128xf32>
      tpu.vector_store %arg6[%c0_19, %c0_20], %23 {strides = array<i32>} : memref<128x128xf32, #tpu.memory_space<vmem>>, vector<128x128xf32>,
    } else {
    }
    return
  }
  func.func @transform_0(%arg0: i32, %arg1: i32) -> (i32, i32) {
    %c0_i32 = arith.constant 0 : i32
    %c0_i32_0 = arith.constant 0 : i32
    return %arg0, %c0_i32 : i32, i32
  }
  func.func @transform_1(%arg0: i32, %arg1: i32) -> (i32, i32) {
    %c0_i32 = arith.constant 0 : i32
    %c0_i32_0 = arith.constant 0 : i32
    return %c0_i32, %arg1 : i32, i32
  }
  func.func @transform_2(%arg0: i32, %arg1: i32) -> (i32, i32) {
    %c0_i32 = arith.constant 0 : i32
    %c0_i32_0 = arith.constant 0 : i32
    return %c0_i32, %arg1 : i32, i32
  }
  func.func @transform_3(%arg0: i32, %arg1: i32) -> (i32, i32) {
    %c0_i32 = arith.constant 0 : i32
    %c0_i32_0 = arith.constant 0 : i32
    return %arg1, %c0_i32 : i32, i32
  }
  func.func @transform_4(%arg0: i32, %arg1: i32) -> (i32, i32) {
    %c0_i32 = arith.constant 0 : i32
    %c0_i32_0 = arith.constant 0 : i32
    return %arg0, %c0_i32 : i32, i32
  }
}

</mosaic_0001>

<llo_original>
// kernel: swiglu.1
$region0: #{swiglu.1}
  #allocation0 [shape = 'u32[]', space=smem, size = 0x4, offset = 0x4, fixed_abs, tag = 'smem constant byte address 0x4 - core index']
  #allocation1 [shape = 'u32[144,128]{1,0:T(1,128)}', space=vmem, size = 0x12000, scoped, tag = 'internal scratch']
  #allocation2 [shape = 'f32[128,128]{1,0:T(8,128)}', space=vmem, size = 0x10000, scoped, tag = 'scratch operand']
  %s0 = inlined_call_operand.hbm [shape: f32[128,128], index: 0, kind: input, shape index: {}]
  %s1 = inlined_call_operand.hbm [shape: f32[128,256], index: 1, kind: input, shape index: {}]
  %s2 = inlined_call_operand.hbm [shape: f32[128,256], index: 2, kind: input, shape index: {}]
  %s3 = inlined_call_operand.hbm [shape: f32[256,128], index: 3, kind: input, shape index: {}]
  %s4 = inlined_call_operand.hbm [shape: f32[128,128], index: 4, kind: output, shape index: {}]
  %s5 = sld [smem:[#allocation0]]
  $region50: #{swiglu.1} parent=0
    _
  %s7 = ssub.s32 1, %s5
  %s8 = scalar_select 0, %s7, %s5
  $region1: #{swiglu.1} parent=0
    #allocation3 [shape = 'u8[65536]{0}', space=vmem, size = 0x10000, scoped, tag = 'input window, operand 0, single buffered']
    #allocation4 [shape = 's32[1]{0}', space=sflag, size = 0x4, scoped, tag = 'scoped memory for swiglu.1']
    #allocation5 [shape = 's32[1]{0}', space=sflag, size = 0x4, scoped, tag = 'scoped memory for swiglu.1']
    #allocation6 [shape = 'u8[131072]{0}', space=vmem, size = 0x20000, scoped, tag = 'input window, operand 1, single buffered']
    #allocation7 [shape = 's32[1]{0}', space=sflag, size = 0x4, scoped, tag = 'scoped memory for swiglu.1']
    #allocation8 [shape = 'u8[131072]{0}', space=vmem, size = 0x20000, scoped, tag = 'input window, operand 2, single buffered']
    #allocation9 [shape = 'u8[131072]{0}', space=vmem, size = 0x20000, scoped, tag = 'input window, operand 3, single buffered']
    #allocation10 [shape = 's32[1]{0}', space=sflag, size = 0x4, scoped, tag = 'scoped memory for swiglu.1']
    #allocation11 [shape = 'u8[65536]{0}', space=vmem, size = 0x10000, scoped, tag = 'output window, operand 0, single buffered']
    %9 = vsyncpa [#allocation4], 0
    %10 = vsyncpa [#allocation7], 0
    %11 = vsyncpa [#allocation10], 0
    %12 = vsyncpa [#allocation5], 0
    // Predicated region
    $region2: #{swiglu.1} parent=1 // pred_check
      _
    $region3: #{swiglu.1} parent=1 // pred_check_branch
      %14 = sbr.rel (0) target = $region5
    $region4: #{swiglu.1} parent=1 // pred_region
      %s16 = ssub.s32 2048, 2048
      %17 = vsyncadd [#allocation4], %s16
      %s18 = sshll.u32 [#allocation3], 4
      %s19 = int_to_ptr.vmem [resolvable:$true] %s18
      %24 = dma.hbm_to_vmem [thread:$0]  %s0, 2048, %s19, [#allocation4], 128, 128, 8
    $region5: #{swiglu.1} parent=1 // pred_fallthru
      _
    // Predicated region
    $region6: #{swiglu.1} parent=1 // pred_check
      _
    $region7: #{swiglu.1} parent=1 // pred_check_branch
      %26 = sbr.rel (0) target = $region9
    $region8: #{swiglu.1} parent=1 // pred_region
      %s28 = ssub.s32 4096, 4096
      %29 = vsyncadd [#allocation7], %s28
      %s30 = sshll.u32 [#allocation6], 4
      %s31 = int_to_ptr.vmem [resolvable:$true] %s30
      %36 = dma.hbm_to_vmem [thread:$0]  %s1, 4096, %s31, [#allocation7], 256, 256, 16
    $region9: #{swiglu.1} parent=1 // pred_fallthru
      _
    // Predicated region
    $region10: #{swiglu.1} parent=1 // pred_check
      _
    $region11: #{swiglu.1} parent=1 // pred_check_branch
      %38 = sbr.rel (0) target = $region13
    $region12: #{swiglu.1} parent=1 // pred_region
      %s40 = ssub.s32 4096, 4096
      %41 = vsyncadd [#allocation7], %s40
      %s42 = sshll.u32 [#allocation8], 4
      %s43 = int_to_ptr.vmem [resolvable:$true] %s42
      %48 = dma.hbm_to_vmem [thread:$0]  %s2, 4096, %s43, [#allocation7], 256, 256, 16
    $region13: #{swiglu.1} parent=1 // pred_fallthru
      _
    // Predicated region
    $region14: #{swiglu.1} parent=1 // pred_check
      _
    $region15: #{swiglu.1} parent=1 // pred_check_branch
      %50 = sbr.rel (0) target = $region17
    $region16: #{swiglu.1} parent=1 // pred_region
      %s52 = ssub.s32 4096, 4096
      %53 = vsyncadd [#allocation10], %s52
      %s54 = sshll.u32 [#allocation9], 4
      %s55 = int_to_ptr.vmem [resolvable:$true] %s54
      %60 = dma.hbm_to_vmem [thread:$0]  %s3, 4096, %s55, [#allocation10], 128, 128, 8
    $region17: #{swiglu.1} parent=1 // pred_fallthru
      _
    // Predicated region
    $region18: #{swiglu.1} parent=1 // pred_check
      _
    $region19: #{swiglu.1} parent=1 // pred_check_branch
      %62 = sbr.rel (0) target = $region21
    $region20: #{swiglu.1} parent=1 // pred_region
      %63 = dma.done [#allocation4], 2048
    $region21: #{swiglu.1} parent=1 // pred_fallthru
      _
    // Predicated region
    $region22: #{swiglu.1} parent=1 // pred_check
      _
    $region23: #{swiglu.1} parent=1 // pred_check_branch
      %65 = sbr.rel (0) target = $region25
    $region24: #{swiglu.1} parent=1 // pred_region
      %66 = dma.done [#allocation7], 4096
    $region25: #{swiglu.1} parent=1 // pred_fallthru
      _
    // Predicated region
    $region26: #{swiglu.1} parent=1 // pred_check
      _
    $region27: #{swiglu.1} parent=1 // pred_check_branch
      %68 = sbr.rel (0) target = $region29
    $region28: #{swiglu.1} parent=1 // pred_region
      %69 = dma.done [#allocation7], 4096
    $region29: #{swiglu.1} parent=1 // pred_fallthru
      _
    // Predicated region
    $region30: #{swiglu.1} parent=1 // pred_check
      _
    $region31: #{swiglu.1} parent=1 // pred_check_branch
      %71 = sbr.rel (0) target = $region33
    $region32: #{swiglu.1} parent=1 // pred_region
      %72 = dma.done [#allocation10], 4096
    $region33: #{swiglu.1} parent=1 // pred_fallthru
      _
    %p73 = scmp.eq.s32.totalorder 0, 0
    // Predicated region
    $region34: #{swiglu.1} parent=1 // pred_check
      %p74 = pneg %p73
    $region35: #{swiglu.1} parent=1 // pred_check_branch
      %76 = sbr.rel (%p74) target = $region37
    $region36: #{swiglu.1} parent=1 // pred_region
      %77 = vst [vmem:[#allocation2] sm:$0xff] 0.0
      %78 = vst [vmem:[#allocation2 + $0x8] sm:$0xff] 0.0
      %79 = vst [vmem:[#allocation2 + $0x10] sm:$0xff] 0.0
      %80 = vst [vmem:[#allocation2 + $0x18] sm:$0xff] 0.0
      %81 = vst [vmem:[#allocation2 + $0x20] sm:$0xff] 0.0
      %82 = vst [vmem:[#allocation2 + $0x28] sm:$0xff] 0.0
      %83 = vst [vmem:[#allocation2 + $0x30] sm:$0xff] 0.0
      %84 = vst [vmem:[#allocation2 + $0x38] sm:$0xff] 0.0
      %85 = vst [vmem:[#allocation2 + $0x40] sm:$0xff] 0.0
      %86 = vst [vmem:[#allocation2 + $0x48] sm:$0xff] 0.0
      %87 = vst [vmem:[#allocation2 + $0x50] sm:$0xff] 0.0
      %88 = vst [vmem:[#allocation2 + $0x58] sm:$0xff] 0.0
      %89 = vst [vmem:[#allocation2 + $0x60] sm:$0xff] 0.0
      %90 = vst [vmem:[#allocation2 + $0x68] sm:$0xff] 0.0
      %91 = vst [vmem:[#allocation2 + $0x70] sm:$0xff] 0.0
      %92 = vst [vmem:[#allocation2 + $0x78] sm:$0xff] 0.0
    $region37: #{swiglu.1} parent=1 // pred_fallthru
      _
    %v93 = vld [vmem:[#allocation3] sm:$0xff]
    %v94 = vld [vmem:[#allocation3 + $0x8] sm:$0xff]
    %v95 = vld [vmem:[#allocation3 + $0x10] sm:$0xff]
    %v96 = vld [vmem:[#allocation3 + $0x18] sm:$0xff]
    %v97 = vld [vmem:[#allocation3 + $0x20] sm:$0xff]
    %v98 = vld [vmem:[#allocation3 + $0x28] sm:$0xff]
    %v99 = vld [vmem:[#allocation3 + $0x30] sm:$0xff]
    %v100 = vld [vmem:[#allocation3 + $0x38] sm:$0xff]
    %v101 = vld [vmem:[#allocation3 + $0x40] sm:$0xff]
    %v102 = vld [vmem:[#allocation3 + $0x48] sm:$0xff]
    %v103 = vld [vmem:[#allocation3 + $0x50] sm:$0xff]
    %v104 = vld [vmem:[#allocation3 + $0x58] sm:$0xff]
    %v105 = vld [vmem:[#allocation3 + $0x60] sm:$0xff]
    %v106 = vld [vmem:[#allocation3 + $0x68] sm:$0xff]
    %v107 = vld [vmem:[#allocation3 + $0x70] sm:$0xff]
    %v108 = vld [vmem:[#allocation3 + $0x78] sm:$0xff]
    %v109 = vld [vmem:[#allocation6] sm:$0xff]
    %v110 = vld [vmem:[#allocation6 + $0x8] sm:$0xff]
    %v111 = vld [vmem:[#allocation6 + $0x10] sm:$0xff]
    %v112 = vld [vmem:[#allocation6 + $0x18] sm:$0xff]
    %v113 = vld [vmem:[#allocation6 + $0x20] sm:$0xff]
    %v114 = vld [vmem:[#allocation6 + $0x28] sm:$0xff]
    %v115 = vld [vmem:[#allocation6 + $0x30] sm:$0xff]
    %v116 = vld [vmem:[#allocation6 + $0x38] sm:$0xff]
    %v117 = vld [vmem:[#allocation6 + $0x40] sm:$0xff]
    %v118 = vld [vmem:[#allocation6 + $0x48] sm:$0xff]
    %v119 = vld [vmem:[#allocation6 + $0x50] sm:$0xff]
    %v120 = vld [vmem:[#allocation6 + $0x58] sm:$0xff]
    %v121 = vld [vmem:[#allocation6 + $0x60] sm:$0xff]
    %v122 = vld [vmem:[#allocation6 + $0x68] sm:$0xff]
    %v123 = vld [vmem:[#allocation6 + $0x70] sm:$0xff]
    %v124 = vld [vmem:[#allocation6 + $0x78] sm:$0xff]
    %v125 = vld [vmem:[#allocation6 + $0x80] sm:$0xff]
    %v126 = vld [vmem:[#allocation6 + $0x88] sm:$0xff]
    %v127 = vld [vmem:[#allocation6 + $0x90] sm:$0xff]
    %v128 = vld [vmem:[#allocation6 + $0x98] sm:$0xff]
    %v129 = vld [vmem:[#allocation6 + $0xa0] sm:$0xff]
    %v130 = vld [vmem:[#allocation6 + $0xa8] sm:$0xff]
    %v131 = vld [vmem:[#allocation6 + $0xb0] sm:$0xff]
    %v132 = vld [vmem:[#allocation6 + $0xb8] sm:$0xff]
    %v133 = vld [vmem:[#allocation6 + $0xc0] sm:$0xff]
    %v134 = vld [vmem:[#allocation6 + $0xc8] sm:$0xff]
    %v135 = vld [vmem:[#allocation6 + $0xd0] sm:$0xff]
    %v136 = vld [vmem:[#allocation6 + $0xd8] sm:$0xff]
    %v137 = vld [vmem:[#allocation6 + $0xe0] sm:$0xff]
    %v138 = vld [vmem:[#allocation6 + $0xe8] sm:$0xff]
    %v139 = vld [vmem:[#allocation6 + $0xf0] sm:$0xff]
    %v140 = vld [vmem:[#allocation6 + $0xf8] sm:$0xff]
    %141 = vmatprep.subr.mxu0 %v140
    %142 = vmatpush1.msra.mxu0 %v139
    %143 = vmatprep.subr.mxu0 %v138
    %144 = vmatpush1.msra.mxu0 %v137
    %145 = vmatprep.subr.mxu0 %v136
    %146 = vmatpush1.msra.mxu0 %v135
    %147 = vmatprep.subr.mxu0 %v134
    %148 = vmatpush1.msra.mxu0 %v133
    %149 = vmatprep.subr.mxu0 %v132
    %150 = vmatpush1.msra.mxu0 %v131
    %151 = vmatprep.subr.mxu0 %v130
    %152 = vmatpush1.msra.mxu0 %v129
    %153 = vmatprep.subr.mxu0 %v128
    %154 = vmatpush1.msra.mxu0 %v127
    %155 = vmatprep.subr.mxu0 %v126
    %156 = vmatpush1.msra.mxu0 %v125
    %157 = vmatprep.subr.mxu0 %v124
    %158 = vmatpush1.msra.mxu0 %v123
    %159 = vmatprep.subr.mxu0 %v122
    %160 = vmatpush1.msra.mxu0 %v121
    %161 = vmatprep.subr.mxu0 %v120
    %162 = vmatpush1.msra.mxu0 %v119
    %163 = vmatprep.subr.mxu0 %v118
    %164 = vmatpush1.msra.mxu0 %v117
    %165 = vmatprep.subr.mxu0 %v116
    %166 = vmatpush1.msra.mxu0 %v115
    %167 = vmatprep.subr.mxu0 %v114
    %168 = vmatpush1.msra.mxu0 %v113
    %169 = vmatprep.subr.mxu0 %v112
    %170 = vmatpush1.msra.mxu0 %v111
    %171 = vmatprep.subr.mxu0 %v110
    %172 = vmatpush1.msra.mxu0 %v109
    %173 = vmatprep.subr.mxu0 0.0
    %174 = vmatpush2.msra.mxu0 0.0
    %175 = vmatprep.subr.mxu0 0.0
    %176 = vmatpush2.msra.mxu0 0.0
    %177 = vmatprep.subr.mxu0 0.0
    %178 = vmatpush2.msra.mxu0 0.0
    %179 = vmatprep.subr.mxu0 0.0
    %180 = vmatpush2.msra.mxu0 0.0
    %181 = vmatprep.subr.mxu0 0.0
    %182 = vmatpush2.msra.mxu0 0.0
    %183 = vmatprep.subr.mxu0 0.0
    %184 = vmatpush2.msra.mxu0 0.0
    %185 = vmatprep.subr.mxu0 0.0
    %186 = vmatpush2.msra.mxu0 0.0
    %187 = vmatprep.subr.mxu0 0.0
    %188 = vmatpush2.msra.mxu0 0.0
    %189 = vmatprep.subr.mxu0 0.0
    %190 = vmatpush2.msra.mxu0 0.0
    %191 = vmatprep.subr.mxu0 0.0
    %192 = vmatpush2.msra.mxu0 0.0
    %193 = vmatprep.subr.mxu0 0.0
    %194 = vmatpush2.msra.mxu0 0.0
    %195 = vmatprep.subr.mxu0 0.0
    %196 = vmatpush2.msra.mxu0 0.0
    %197 = vmatprep.subr.mxu0 0.0
    %198 = vmatpush2.msra.mxu0 0.0
    %199 = vmatprep.subr.mxu0 0.0
    %200 = vmatpush2.msra.mxu0 0.0
    %201 = vmatprep.subr.mxu0 0.0
    %202 = vmatpush2.msra.mxu0 0.0
    %203 = vmatprep.subr.mxu0 0.0
    %204 = vmatpush2.msra.mxu0 0.0
    %205 = vmatprep.mubr.f32.mxu0 0.0
    %206 = vmatmul.mubr.f32.gmra.mxu0 %v93
    %v207 = vpop.f32.mrf.mxu0
    %v208 = vadd.f32 0.0, %v207
    %v209 = vpop.f32.mrf.mxu0
    %v210 = vadd.f32 0.0, %v209
    %211 = vmatprep.mubr.f32.mxu0 0.0
    %212 = vmatmul.mubr.f32.gmra.mxu0 %v94
    %v213 = vpop.f32.mrf.mxu0
    %v214 = vadd.f32 0.0, %v213
    %v215 = vpop.f32.mrf.mxu0
    %v216 = vadd.f32 0.0, %v215
    %217 = vmatprep.mubr.f32.mxu0 0.0
    %218 = vmatmul.mubr.f32.gmra.mxu0 %v95
    %v219 = vpop.f32.mrf.mxu0
    %v220 = vadd.f32 0.0, %v219
    %v221 = vpop.f32.mrf.mxu0
    %v222 = vadd.f32 0.0, %v221
    %223 = vmatprep.mubr.f32.mxu0 0.0
    %224 = vmatmul.mubr.f32.gmra.mxu0 %v96
    %v225 = vpop.f32.mrf.mxu0
    %v226 = vadd.f32 0.0, %v225
    %v227 = vpop.f32.mrf.mxu0
    %v228 = vadd.f32 0.0, %v227
    %229 = vmatprep.mubr.f32.mxu0 0.0
    %230 = vmatmul.mubr.f32.gmra.mxu0 %v97
    %v231 = vpop.f32.mrf.mxu0
    %v232 = vadd.f32 0.0, %v231
    %v233 = vpop.f32.mrf.mxu0
    %v234 = vadd.f32 0.0, %v233
    %235 = vmatprep.mubr.f32.mxu0 0.0
    %236 = vmatmul.mubr.f32.gmra.mxu0 %v98
    %v237 = vpop.f32.mrf.mxu0
    %v238 = vadd.f32 0.0, %v237
    %v239 = vpop.f32.mrf.mxu0
    %v240 = vadd.f32 0.0, %v239
    %241 = vmatprep.mubr.f32.mxu0 0.0
    %242 = vmatmul.mubr.f32.gmra.mxu0 %v99
    %v243 = vpop.f32.mrf.mxu0
    %v244 = vadd.f32 0.0, %v243
    %v245 = vpop.f32.mrf.mxu0
    %v246 = vadd.f32 0.0, %v245
    %247 = vmatprep.mubr.f32.mxu0 0.0
    %248 = vmatmul.mubr.f32.gmra.mxu0 %v100
    %v249 = vpop.f32.mrf.mxu0
    %v250 = vadd.f32 0.0, %v249
    %v251 = vpop.f32.mrf.mxu0
    %v252 = vadd.f32 0.0, %v251
    %253 = vmatprep.mubr.f32.mxu0 0.0
    %254 = vmatmul.mubr.f32.gmra.mxu0 %v101
    %v255 = vpop.f32.mrf.mxu0
    %v256 = vadd.f32 0.0, %v255
    %v257 = vpop.f32.mrf.mxu0
    %v258 = vadd.f32 0.0, %v257
    %259 = vmatprep.mubr.f32.mxu0 0.0
    %260 = vmatmul.mubr.f32.gmra.mxu0 %v102
    %v261 = vpop.f32.mrf.mxu0
    %v262 = vadd.f32 0.0, %v261
    %v263 = vpop.f32.mrf.mxu0
    %v264 = vadd.f32 0.0, %v263
    %265 = vmatprep.mubr.f32.mxu0 0.0
    %266 = vmatmul.mubr.f32.gmra.mxu0 %v103
    %v267 = vpop.f32.mrf.mxu0
    %v268 = vadd.f32 0.0, %v267
    %v269 = vpop.f32.mrf.mxu0
    %v270 = vadd.f32 0.0, %v269
    %271 = vmatprep.mubr.f32.mxu0 0.0
    %272 = vmatmul.mubr.f32.gmra.mxu0 %v104
    %v273 = vpop.f32.mrf.mxu0
    %v274 = vadd.f32 0.0, %v273
    %v275 = vpop.f32.mrf.mxu0
    %v276 = vadd.f32 0.0, %v275
    %277 = vmatprep.mubr.f32.mxu0 0.0
    %278 = vmatmul.mubr.f32.gmra.mxu0 %v105
    %v279 = vpop.f32.mrf.mxu0
    %v280 = vadd.f32 0.0, %v279
    %v281 = vpop.f32.mrf.mxu0
    %v282 = vadd.f32 0.0, %v281
    %283 = vmatprep.mubr.f32.mxu0 0.0
    %284 = vmatmul.mubr.f32.gmra.mxu0 %v106
    %v285 = vpop.f32.mrf.mxu0
    %v286 = vadd.f32 0.0, %v285
    %v287 = vpop.f32.mrf.mxu0
    %v288 = vadd.f32 0.0, %v287
    %289 = vmatprep.mubr.f32.mxu0 0.0
    %290 = vmatmul.mubr.f32.gmra.mxu0 %v107
    %v291 = vpop.f32.mrf.mxu0
    %v292 = vadd.f32 0.0, %v291
    %v293 = vpop.f32.mrf.mxu0
    %v294 = vadd.f32 0.0, %v293
    %295 = vmatprep.mubr.f32.mxu0 0.0
    %296 = vmatmul.mubr.f32.gmra.mxu0 %v108
    %v297 = vpop.f32.mrf.mxu0
    %v298 = vadd.f32 0.0, %v297
    %v299 = vpop.f32.mrf.mxu0
    %v300 = vadd.f32 0.0, %v299
    %301 = vdwg.mxu0
    %v302 = vld [vmem:[#allocation8] sm:$0xff]
    %v303 = vld [vmem:[#allocation8 + $0x8] sm:$0xff]
    %v304 = vld [vmem:[#allocation8 + $0x10] sm:$0xff]
    %v305 = vld [vmem:[#allocation8 + $0x18] sm:$0xff]
    %v306 = vld [vmem:[#allocation8 + $0x20] sm:$0xff]
    %v307 = vld [vmem:[#allocation8 + $0x28] sm:$0xff]
    %v308 = vld [vmem:[#allocation8 + $0x30] sm:$0xff]
    %v309 = vld [vmem:[#allocation8 + $0x38] sm:$0xff]
    %v310 = vld [vmem:[#allocation8 + $0x40] sm:$0xff]
    %v311 = vld [vmem:[#allocation8 + $0x48] sm:$0xff]
    %v312 = vld [vmem:[#allocation8 + $0x50] sm:$0xff]
    %v313 = vld [vmem:[#allocation8 + $0x58] sm:$0xff]
    %v314 = vld [vmem:[#allocation8 + $0x60] sm:$0xff]
    %v315 = vld [vmem:[#allocation8 + $0x68] sm:$0xff]
    %v316 = vld [vmem:[#allocation8 + $0x70] sm:$0xff]
    %v317 = vld [vmem:[#allocation8 + $0x78] sm:$0xff]
    %v318 = vld [vmem:[#allocation8 + $0x80] sm:$0xff]
    %v319 = vld [vmem:[#allocation8 + $0x88] sm:$0xff]
    %v320 = vld [vmem:[#allocation8 + $0x90] sm:$0xff]
    %v321 = vld [vmem:[#allocation8 + $0x98] sm:$0xff]
    %v322 = vld [vmem:[#allocation8 + $0xa0] sm:$0xff]
    %v323 = vld [vmem:[#allocation8 + $0xa8] sm:$0xff]
    %v324 = vld [vmem:[#allocation8 + $0xb0] sm:$0xff]
    %v325 = vld [vmem:[#allocation8 + $0xb8] sm:$0xff]
    %v326 = vld [vmem:[#allocation8 + $0xc0] sm:$0xff]
    %v327 = vld [vmem:[#allocation8 + $0xc8] sm:$0xff]
    %v328 = vld [vmem:[#allocation8 + $0xd0] sm:$0xff]
    %v329 = vld [vmem:[#allocation8 + $0xd8] sm:$0xff]
    %v330 = vld [vmem:[#allocation8 + $0xe0] sm:$0xff]
    %v331 = vld [vmem:[#allocation8 + $0xe8] sm:$0xff]
    %v332 = vld [vmem:[#allocation8 + $0xf0] sm:$0xff]
    %v333 = vld [vmem:[#allocation8 + $0xf8] sm:$0xff]
    %334 = vmatprep.subr.mxu0 %v333
    %335 = vmatpush1.msra.mxu0 %v332
    %336 = vmatprep.subr.mxu0 %v331
    %337 = vmatpush1.msra.mxu0 %v330
    %338 = vmatprep.subr.mxu0 %v329
    %339 = vmatpush1.msra.mxu0 %v328
    %340 = vmatprep.subr.mxu0 %v327
    %341 = vmatpush1.msra.mxu0 %v326
    %342 = vmatprep.subr.mxu0 %v325
    %343 = vmatpush1.msra.mxu0 %v324
    %344 = vmatprep.subr.mxu0 %v323
    %345 = vmatpush1.msra.mxu0 %v322
    %346 = vmatprep.subr.mxu0 %v321
    %347 = vmatpush1.msra.mxu0 %v320
    %348 = vmatprep.subr.mxu0 %v319
    %349 = vmatpush1.msra.mxu0 %v318
    %350 = vmatprep.subr.mxu0 %v317
    %351 = vmatpush1.msra.mxu0 %v316
    %352 = vmatprep.subr.mxu0 %v315
    %353 = vmatpush1.msra.mxu0 %v314
    %354 = vmatprep.subr.mxu0 %v313
    %355 = vmatpush1.msra.mxu0 %v312
    %356 = vmatprep.subr.mxu0 %v311
    %357 = vmatpush1.msra.mxu0 %v310
    %358 = vmatprep.subr.mxu0 %v309
    %359 = vmatpush1.msra.mxu0 %v308
    %360 = vmatprep.subr.mxu0 %v307
    %361 = vmatpush1.msra.mxu0 %v306
    %362 = vmatprep.subr.mxu0 %v305
    %363 = vmatpush1.msra.mxu0 %v304
    %364 = vmatprep.subr.mxu0 %v303
    %365 = vmatpush1.msra.mxu0 %v302
    %366 = vmatprep.subr.mxu0 0.0
    %367 = vmatpush2.msra.mxu0 0.0
    %368 = vmatprep.subr.mxu0 0.0
    %369 = vmatpush2.msra.mxu0 0.0
    %370 = vmatprep.subr.mxu0 0.0
    %371 = vmatpush2.msra.mxu0 0.0
    %372 = vmatprep.subr.mxu0 0.0
    %373 = vmatpush2.msra.mxu0 0.0
    %374 = vmatprep.subr.mxu0 0.0
    %375 = vmatpush2.msra.mxu0 0.0
    %376 = vmatprep.subr.mxu0 0.0
    %377 = vmatpush2.msra.mxu0 0.0
    %378 = vmatprep.subr.mxu0 0.0
    %379 = vmatpush2.msra.mxu0 0.0
    %380 = vmatprep.subr.mxu0 0.0
    %381 = vmatpush2.msra.mxu0 0.0
    %382 = vmatprep.subr.mxu0 0.0
    %383 = vmatpush2.msra.mxu0 0.0
    %384 = vmatprep.subr.mxu0 0.0
    %385 = vmatpush2.msra.mxu0 0.0
    %386 = vmatprep.subr.mxu0 0.0
    %387 = vmatpush2.msra.mxu0 0.0
    %388 = vmatprep.subr.mxu0 0.0
    %389 = vmatpush2.msra.mxu0 0.0
    %390 = vmatprep.subr.mxu0 0.0
    %391 = vmatpush2.msra.mxu0 0.0
    %392 = vmatprep.subr.mxu0 0.0
    %393 = vmatpush2.msra.mxu0 0.0
    %394 = vmatprep.subr.mxu0 0.0
    %395 = vmatpush2.msra.mxu0 0.0
    %396 = vmatprep.subr.mxu0 0.0
    %397 = vmatpush2.msra.mxu0 0.0
    %398 = vmatprep.mubr.f32.mxu0 0.0
    %399 = vmatmul.mubr.f32.gmra.mxu0 %v93
    %v400 = vpop.f32.mrf.mxu0
    %v401 = vadd.f32 0.0, %v400
    %v402 = vpop.f32.mrf.mxu0
    %v403 = vadd.f32 0.0, %v402
    %404 = vmatprep.mubr.f32.mxu0 0.0
    %405 = vmatmul.mubr.f32.gmra.mxu0 %v94
    %v406 = vpop.f32.mrf.mxu0
    %v407 = vadd.f32 0.0, %v406
    %v408 = vpop.f32.mrf.mxu0
    %v409 = vadd.f32 0.0, %v408
    %410 = vmatprep.mubr.f32.mxu0 0.0
    %411 = vmatmul.mubr.f32.gmra.mxu0 %v95
    %v412 = vpop.f32.mrf.mxu0
    %v413 = vadd.f32 0.0, %v412
    %v414 = vpop.f32.mrf.mxu0
    %v415 = vadd.f32 0.0, %v414
    %416 = vmatprep.mubr.f32.mxu0 0.0
    %417 = vmatmul.mubr.f32.gmra.mxu0 %v96
    %v418 = vpop.f32.mrf.mxu0
    %v419 = vadd.f32 0.0, %v418
    %v420 = vpop.f32.mrf.mxu0
    %v421 = vadd.f32 0.0, %v420
    %422 = vmatprep.mubr.f32.mxu0 0.0
    %423 = vmatmul.mubr.f32.gmra.mxu0 %v97
    %v424 = vpop.f32.mrf.mxu0
    %v425 = vadd.f32 0.0, %v424
    %v426 = vpop.f32.mrf.mxu0
    %v427 = vadd.f32 0.0, %v426
    %428 = vmatprep.mubr.f32.mxu0 0.0
    %429 = vmatmul.mubr.f32.gmra.mxu0 %v98
    %v430 = vpop.f32.mrf.mxu0
    %v431 = vadd.f32 0.0, %v430
    %v432 = vpop.f32.mrf.mxu0
    %v433 = vadd.f32 0.0, %v432
    %434 = vmatprep.mubr.f32.mxu0 0.0
    %435 = vmatmul.mubr.f32.gmra.mxu0 %v99
    %v436 = vpop.f32.mrf.mxu0
    %v437 = vadd.f32 0.0, %v436
    %v438 = vpop.f32.mrf.mxu0
    %v439 = vadd.f32 0.0, %v438
    %440 = vmatprep.mubr.f32.mxu0 0.0
    %441 = vmatmul.mubr.f32.gmra.mxu0 %v100
    %v442 = vpop.f32.mrf.mxu0
    %v443 = vadd.f32 0.0, %v442
    %v444 = vpop.f32.mrf.mxu0
    %v445 = vadd.f32 0.0, %v444
    %446 = vmatprep.mubr.f32.mxu0 0.0
    %447 = vmatmul.mubr.f32.gmra.mxu0 %v101
    %v448 = vpop.f32.mrf.mxu0
    %v449 = vadd.f32 0.0, %v448
    %v450 = vpop.f32.mrf.mxu0
    %v451 = vadd.f32 0.0, %v450
    %452 = vmatprep.mubr.f32.mxu0 0.0
    %453 = vmatmul.mubr.f32.gmra.mxu0 %v102
    %v454 = vpop.f32.mrf.mxu0
    %v455 = vadd.f32 0.0, %v454
    %v456 = vpop.f32.mrf.mxu0
    %v457 = vadd.f32 0.0, %v456
    %458 = vmatprep.mubr.f32.mxu0 0.0
    %459 = vmatmul.mubr.f32.gmra.mxu0 %v103
    %v460 = vpop.f32.mrf.mxu0
    %v461 = vadd.f32 0.0, %v460
    %v462 = vpop.f32.mrf.mxu0
    %v463 = vadd.f32 0.0, %v462
    %464 = vmatprep.mubr.f32.mxu0 0.0
    %465 = vmatmul.mubr.f32.gmra.mxu0 %v104
    %v466 = vpop.f32.mrf.mxu0
    %v467 = vadd.f32 0.0, %v466
    %v468 = vpop.f32.mrf.mxu0
    %v469 = vadd.f32 0.0, %v468
    %470 = vmatprep.mubr.f32.mxu0 0.0
    %471 = vmatmul.mubr.f32.gmra.mxu0 %v105
    %v472 = vpop.f32.mrf.mxu0
    %v473 = vadd.f32 0.0, %v472
    %v474 = vpop.f32.mrf.mxu0
    %v475 = vadd.f32 0.0, %v474
    %476 = vmatprep.mubr.f32.mxu0 0.0
    %477 = vmatmul.mubr.f32.gmra.mxu0 %v106
    %v478 = vpop.f32.mrf.mxu0
    %v479 = vadd.f32 0.0, %v478
    %v480 = vpop.f32.mrf.mxu0
    %v481 = vadd.f32 0.0, %v480
    %482 = vmatprep.mubr.f32.mxu0 0.0
    %483 = vmatmul.mubr.f32.gmra.mxu0 %v107
    %v484 = vpop.f32.mrf.mxu0
    %v485 = vadd.f32 0.0, %v484
    %v486 = vpop.f32.mrf.mxu0
    %v487 = vadd.f32 0.0, %v486
    %488 = vmatprep.mubr.f32.mxu0 0.0
    %489 = vmatmul.mubr.f32.gmra.mxu0 %v108
    %v490 = vpop.f32.mrf.mxu0
    %v491 = vadd.f32 0.0, %v490
    %v492 = vpop.f32.mrf.mxu0
    %v493 = vadd.f32 0.0, %v492
    %494 = vdwg.mxu0
    %v495 = vxor.u32 %v208, 2147483648
    %v496 = vxor.u32 %v210, 2147483648
    %v497 = vxor.u32 %v214, 2147483648
    %v498 = vxor.u32 %v216, 2147483648
    %v499 = vxor.u32 %v220, 2147483648
    %v500 = vxor.u32 %v222, 2147483648
    %v501 = vxor.u32 %v226, 2147483648
    %v502 = vxor.u32 %v228, 2147483648
    %v503 = vxor.u32 %v232, 2147483648
    %v504 = vxor.u32 %v234, 2147483648
    %v505 = vxor.u32 %v238, 2147483648
    %v506 = vxor.u32 %v240, 2147483648
    %v507 = vxor.u32 %v244, 2147483648
    %v508 = vxor.u32 %v246, 2147483648
    %v509 = vxor.u32 %v250, 2147483648
    %v510 = vxor.u32 %v252, 2147483648
    %v511 = vxor.u32 %v256, 2147483648
    %v512 = vxor.u32 %v258, 2147483648
    %v513 = vxor.u32 %v262, 2147483648
    %v514 = vxor.u32 %v264, 2147483648
    %v515 = vxor.u32 %v268, 2147483648
    %v516 = vxor.u32 %v270, 2147483648
    %v517 = vxor.u32 %v274, 2147483648
    %v518 = vxor.u32 %v276, 2147483648
    %v519 = vxor.u32 %v280, 2147483648
    %v520 = vxor.u32 %v282, 2147483648
    %v521 = vxor.u32 %v286, 2147483648
    %v522 = vxor.u32 %v288, 2147483648
    %v523 = vxor.u32 %v292, 2147483648
    %v524 = vxor.u32 %v294, 2147483648
    %v525 = vxor.u32 %v298, 2147483648
    %v526 = vxor.u32 %v300, 2147483648
    %v527 = vmul.f32 %v495, 1.442695
    %v528 = vpow.pop %v527
    %v529 = vmul.f32 %v496, 1.442695
    %v530 = vpow.pop %v529
    %v531 = vmul.f32 %v497, 1.442695
    %v532 = vpow.pop %v531
    %v533 = vmul.f32 %v498, 1.442695
    %v534 = vpow.pop %v533
    %v535 = vmul.f32 %v499, 1.442695
    %v536 = vpow.pop %v535
    %v537 = vmul.f32 %v500, 1.442695
    %v538 = vpow.pop %v537
    %v539 = vmul.f32 %v501, 1.442695
    %v540 = vpow.pop %v539
    %v541 = vmul.f32 %v502, 1.442695
    %v542 = vpow.pop %v541
    %v543 = vmul.f32 %v503, 1.442695
    %v544 = vpow.pop %v543
    %v545 = vmul.f32 %v504, 1.442695
    %v546 = vpow.pop %v545
    %v547 = vmul.f32 %v505, 1.442695
    %v548 = vpow.pop %v547
    %v549 = vmul.f32 %v506, 1.442695
    %v550 = vpow.pop %v549
    %v551 = vmul.f32 %v507, 1.442695
    %v552 = vpow.pop %v551
    %v553 = vmul.f32 %v508, 1.442695
    %v554 = vpow.pop %v553
    %v555 = vmul.f32 %v509, 1.442695
    %v556 = vpow.pop %v555
    %v557 = vmul.f32 %v510, 1.442695
    %v558 = vpow.pop %v557
    %v559 = vmul.f32 %v511, 1.442695
    %v560 = vpow.pop %v559
    %v561 = vmul.f32 %v512, 1.442695
    %v562 = vpow.pop %v561
    %v563 = vmul.f32 %v513, 1.442695
    %v564 = vpow.pop %v563
    %v565 = vmul.f32 %v514, 1.442695
    %v566 = vpow.pop %v565
    %v567 = vmul.f32 %v515, 1.442695
    %v568 = vpow.pop %v567
    %v569 = vmul.f32 %v516, 1.442695
    %v570 = vpow.pop %v569
    %v571 = vmul.f32 %v517, 1.442695
    %v572 = vpow.pop %v571
    %v573 = vmul.f32 %v518, 1.442695
    %v574 = vpow.pop %v573
    %v575 = vmul.f32 %v519, 1.442695
    %v576 = vpow.pop %v575
    %v577 = vmul.f32 %v520, 1.442695
    %v578 = vpow.pop %v577
    %v579 = vmul.f32 %v521, 1.442695
    %v580 = vpow.pop %v579
    %v581 = vmul.f32 %v522, 1.442695
    %v582 = vpow.pop %v581
    %v583 = vmul.f32 %v523, 1.442695
    %v584 = vpow.pop %v583
    %v585 = vmul.f32 %v524, 1.442695
    %v586 = vpow.pop %v585
    %v587 = vmul.f32 %v525, 1.442695
    %v588 = vpow.pop %v587
    %v589 = vmul.f32 %v526, 1.442695
    %v590 = vpow.pop %v589
    %v591 = vadd.f32 %v528, 1.0
    %v592 = vadd.f32 %v530, 1.0
    %v593 = vadd.f32 %v532, 1.0
    %v594 = vadd.f32 %v534, 1.0
    %v595 = vadd.f32 %v536, 1.0
    %v596 = vadd.f32 %v538, 1.0
    %v597 = vadd.f32 %v540, 1.0
    %v598 = vadd.f32 %v542, 1.0
    %v599 = vadd.f32 %v544, 1.0
    %v600 = vadd.f32 %v546, 1.0
    %v601 = vadd.f32 %v548, 1.0
    %v602 = vadd.f32 %v550, 1.0
    %v603 = vadd.f32 %v552, 1.0
    %v604 = vadd.f32 %v554, 1.0
    %v605 = vadd.f32 %v556, 1.0
    %v606 = vadd.f32 %v558, 1.0
    %v607 = vadd.f32 %v560, 1.0
    %v608 = vadd.f32 %v562, 1.0
    %v609 = vadd.f32 %v564, 1.0
    %v610 = vadd.f32 %v566, 1.0
    %v611 = vadd.f32 %v568, 1.0
    %v612 = vadd.f32 %v570, 1.0
    %v613 = vadd.f32 %v572, 1.0
    %v614 = vadd.f32 %v574, 1.0
    %v615 = vadd.f32 %v576, 1.0
    %v616 = vadd.f32 %v578, 1.0
    %v617 = vadd.f32 %v580, 1.0
    %v618 = vadd.f32 %v582, 1.0
    %v619 = vadd.f32 %v584, 1.0
    %v620 = vadd.f32 %v586, 1.0
    %v621 = vadd.f32 %v588, 1.0
    %v622 = vadd.f32 %v590, 1.0
    %v623 = vrcp.pop %v591
    %v624 = vmul.f32 1.0, %v623
    %v625 = vrcp.pop %v592
    %v626 = vmul.f32 1.0, %v625
    %v627 = vrcp.pop %v593
    %v628 = vmul.f32 1.0, %v627
    %v629 = vrcp.pop %v594
    %v630 = vmul.f32 1.0, %v629
    %v631 = vrcp.pop %v595
    %v632 = vmul.f32 1.0, %v631
    %v633 = vrcp.pop %v596
    %v634 = vmul.f32 1.0, %v633
    %v635 = vrcp.pop %v597
    %v636 = vmul.f32 1.0, %v635
    %v637 = vrcp.pop %v598
    %v638 = vmul.f32 1.0, %v637
    %v639 = vrcp.pop %v599
    %v640 = vmul.f32 1.0, %v639
    %v641 = vrcp.pop %v600
    %v642 = vmul.f32 1.0, %v641
    %v643 = vrcp.pop %v601
    %v644 = vmul.f32 1.0, %v643
    %v645 = vrcp.pop %v602
    %v646 = vmul.f32 1.0, %v645
    %v647 = vrcp.pop %v603
    %v648 = vmul.f32 1.0, %v647
    %v649 = vrcp.pop %v604
    %v650 = vmul.f32 1.0, %v649
    %v651 = vrcp.pop %v605
    %v652 = vmul.f32 1.0, %v651
    %v653 = vrcp.pop %v606
    %v654 = vmul.f32 1.0, %v653
    %v655 = vrcp.pop %v607
    %v656 = vmul.f32 1.0, %v655
    %v657 = vrcp.pop %v608
    %v658 = vmul.f32 1.0, %v657
    %v659 = vrcp.pop %v609
    %v660 = vmul.f32 1.0, %v659
    %v661 = vrcp.pop %v610
    %v662 = vmul.f32 1.0, %v661
    %v663 = vrcp.pop %v611
    %v664 = vmul.f32 1.0, %v663
    %v665 = vrcp.pop %v612
    %v666 = vmul.f32 1.0, %v665
    %v667 = vrcp.pop %v613
    %v668 = vmul.f32 1.0, %v667
    %v669 = vrcp.pop %v614
    %v670 = vmul.f32 1.0, %v669
    %v671 = vrcp.pop %v615
    %v672 = vmul.f32 1.0, %v671
    %v673 = vrcp.pop %v616
    %v674 = vmul.f32 1.0, %v673
    %v675 = vrcp.pop %v617
    %v676 = vmul.f32 1.0, %v675
    %v677 = vrcp.pop %v618
    %v678 = vmul.f32 1.0, %v677
    %v679 = vrcp.pop %v619
    %v680 = vmul.f32 1.0, %v679
    %v681 = vrcp.pop %v620
    %v682 = vmul.f32 1.0, %v681
    %v683 = vrcp.pop %v621
    %v684 = vmul.f32 1.0, %v683
    %v685 = vrcp.pop %v622
    %v686 = vmul.f32 1.0, %v685
    %v687 = vmul.f32 %v208, %v624
    %v688 = vmul.f32 %v210, %v626
    %v689 = vmul.f32 %v214, %v628
    %v690 = vmul.f32 %v216, %v630
    %v691 = vmul.f32 %v220, %v632
    %v692 = vmul.f32 %v222, %v634
    %v693 = vmul.f32 %v226, %v636
    %v694 = vmul.f32 %v228, %v638
    %v695 = vmul.f32 %v232, %v640
    %v696 = vmul.f32 %v234, %v642
    %v697 = vmul.f32 %v238, %v644
    %v698 = vmul.f32 %v240, %v646
    %v699 = vmul.f32 %v244, %v648
    %v700 = vmul.f32 %v246, %v650
    %v701 = vmul.f32 %v250, %v652
    %v702 = vmul.f32 %v252, %v654
    %v703 = vmul.f32 %v256, %v656
    %v704 = vmul.f32 %v258, %v658
    %v705 = vmul.f32 %v262, %v660
    %v706 = vmul.f32 %v264, %v662
    %v707 = vmul.f32 %v268, %v664
    %v708 = vmul.f32 %v270, %v666
    %v709 = vmul.f32 %v274, %v668
    %v710 = vmul.f32 %v276, %v670
    %v711 = vmul.f32 %v280, %v672
    %v712 = vmul.f32 %v282, %v674
    %v713 = vmul.f32 %v286, %v676
    %v714 = vmul.f32 %v288, %v678
    %v715 = vmul.f32 %v292, %v680
    %v716 = vmul.f32 %v294, %v682
    %v717 = vmul.f32 %v298, %v684
    %v718 = vmul.f32 %v300, %v686
    %v719 = vmul.f32 %v687, %v401
    %v720 = vmul.f32 %v688, %v403
    %v721 = vmul.f32 %v689, %v407
    %v722 = vmul.f32 %v690, %v409
    %v723 = vmul.f32 %v691, %v413
    %v724 = vmul.f32 %v692, %v415
    %v725 = vmul.f32 %v693, %v419
    %v726 = vmul.f32 %v694, %v421
    %v727 = vmul.f32 %v695, %v425
    %v728 = vmul.f32 %v696, %v427
    %v729 = vmul.f32 %v697, %v431
    %v730 = vmul.f32 %v698, %v433
    %v731 = vmul.f32 %v699, %v437
    %v732 = vmul.f32 %v700, %v439
    %v733 = vmul.f32 %v701, %v443
    %v734 = vmul.f32 %v702, %v445
    %v735 = vmul.f32 %v703, %v449
    %v736 = vmul.f32 %v704, %v451
    %v737 = vmul.f32 %v705, %v455
    %v738 = vmul.f32 %v706, %v457
    %v739 = vmul.f32 %v707, %v461
    %v740 = vmul.f32 %v708, %v463
    %v741 = vmul.f32 %v709, %v467
    %v742 = vmul.f32 %v710, %v469
    %v743 = vmul.f32 %v711, %v473
    %v744 = vmul.f32 %v712, %v475
    %v745 = vmul.f32 %v713, %v479
    %v746 = vmul.f32 %v714, %v481
    %v747 = vmul.f32 %v715, %v485
    %v748 = vmul.f32 %v716, %v487
    %v749 = vmul.f32 %v717, %v491
    %v750 = vmul.f32 %v718, %v493
    %v751 = vld [vmem:[#allocation2] sm:$0xff]
    %v752 = vld [vmem:[#allocation2 + $0x8] sm:$0xff]
    %v753 = vld [vmem:[#allocation2 + $0x10] sm:$0xff]
    %v754 = vld [vmem:[#allocation2 + $0x18] sm:$0xff]
    %v755 = vld [vmem:[#allocation2 + $0x20] sm:$0xff]
    %v756 = vld [vmem:[#allocation2 + $0x28] sm:$0xff]
    %v757 = vld [vmem:[#allocation2 + $0x30] sm:$0xff]
    %v758 = vld [vmem:[#allocation2 + $0x38] sm:$0xff]
    %v759 = vld [vmem:[#allocation2 + $0x40] sm:$0xff]
    %v760 = vld [vmem:[#allocation2 + $0x48] sm:$0xff]
    %v761 = vld [vmem:[#allocation2 + $0x50] sm:$0xff]
    %v762 = vld [vmem:[#allocation2 + $0x58] sm:$0xff]
    %v763 = vld [vmem:[#allocation2 + $0x60] sm:$0xff]
    %v764 = vld [vmem:[#allocation2 + $0x68] sm:$0xff]
    %v765 = vld [vmem:[#allocation2 + $0x70] sm:$0xff]
    %v766 = vld [vmem:[#allocation2 + $0x78] sm:$0xff]
    %v767 = vld [vmem:[#allocation9] sm:$0xff]
    %v768 = vld [vmem:[#allocation9 + $0x8] sm:$0xff]
    %v769 = vld [vmem:[#allocation9 + $0x10] sm:$0xff]
    %v770 = vld [vmem:[#allocation9 + $0x18] sm:$0xff]
    %v771 = vld [vmem:[#allocation9 + $0x20] sm:$0xff]
    %v772 = vld [vmem:[#allocation9 + $0x28] sm:$0xff]
    %v773 = vld [vmem:[#allocation9 + $0x30] sm:$0xff]
    %v774 = vld [vmem:[#allocation9 + $0x38] sm:$0xff]
    %v775 = vld [vmem:[#allocation9 + $0x40] sm:$0xff]
    %v776 = vld [vmem:[#allocation9 + $0x48] sm:$0xff]
    %v777 = vld [vmem:[#allocation9 + $0x50] sm:$0xff]
    %v778 = vld [vmem:[#allocation9 + $0x58] sm:$0xff]
    %v779 = vld [vmem:[#allocation9 + $0x60] sm:$0xff]
    %v780 = vld [vmem:[#allocation9 + $0x68] sm:$0xff]
    %v781 = vld [vmem:[#allocation9 + $0x70] sm:$0xff]
    %v782 = vld [vmem:[#allocation9 + $0x78] sm:$0xff]
    %v783 = vld [vmem:[#allocation9 + $0x80] sm:$0xff]
    %v784 = vld [vmem:[#allocation9 + $0x88] sm:$0xff]
    %v785 = vld [vmem:[#allocation9 + $0x90] sm:$0xff]
    %v786 = vld [vmem:[#allocation9 + $0x98] sm:$0xff]
    %v787 = vld [vmem:[#allocation9 + $0xa0] sm:$0xff]
    %v788 = vld [vmem:[#allocation9 + $0xa8] sm:$0xff]
    %v789 = vld [vmem:[#allocation9 + $0xb0] sm:$0xff]
    %v790 = vld [vmem:[#allocation9 + $0xb8] sm:$0xff]
    %v791 = vld [vmem:[#allocation9 + $0xc0] sm:$0xff]
    %v792 = vld [vmem:[#allocation9 + $0xc8] sm:$0xff]
    %v793 = vld [vmem:[#allocation9 + $0xd0] sm:$0xff]
    %v794 = vld [vmem:[#allocation9 + $0xd8] sm:$0xff]
    %v795 = vld [vmem:[#allocation9 + $0xe0] sm:$0xff]
    %v796 = vld [vmem:[#allocation9 + $0xe8] sm:$0xff]
    %v797 = vld [vmem:[#allocation9 + $0xf0] sm:$0xff]
    %v798 = vld [vmem:[#allocation9 + $0xf8] sm:$0xff]
    %799 = vmatprep.subr.mxu0 0.0
    %800 = vmatpush1.msra.mxu0 %v782
    %801 = vmatprep.subr.mxu0 0.0
    %802 = vmatpush1.msra.mxu0 %v781
    %803 = vmatprep.subr.mxu0 0.0
    %804 = vmatpush1.msra.mxu0 %v780
    %805 = vmatprep.subr.mxu0 0.0
    %806 = vmatpush1.msra.mxu0 %v779
    %807 = vmatprep.subr.mxu0 0.0
    %808 = vmatpush1.msra.mxu0 %v778
    %809 = vmatprep.subr.mxu0 0.0
    %810 = vmatpush1.msra.mxu0 %v777
    %811 = vmatprep.subr.mxu0 0.0
    %812 = vmatpush1.msra.mxu0 %v776
    %813 = vmatprep.subr.mxu0 0.0
    %814 = vmatpush1.msra.mxu0 %v775
    %815 = vmatprep.subr.mxu0 0.0
    %816 = vmatpush1.msra.mxu0 %v774
    %817 = vmatprep.subr.mxu0 0.0
    %818 = vmatpush1.msra.mxu0 %v773
    %819 = vmatprep.subr.mxu0 0.0
    %820 = vmatpush1.msra.mxu0 %v772
    %821 = vmatprep.subr.mxu0 0.0
    %822 = vmatpush1.msra.mxu0 %v771
    %823 = vmatprep.subr.mxu0 0.0
    %824 = vmatpush1.msra.mxu0 %v770
    %825 = vmatprep.subr.mxu0 0.0
    %826 = vmatpush1.msra.mxu0 %v769
    %827 = vmatprep.subr.mxu0 0.0
    %828 = vmatpush1.msra.mxu0 %v768
    %829 = vmatprep.subr.mxu0 0.0
    %830 = vmatpush1.msra.mxu0 %v767
    %831 = vmatprep.subr.mxu0 0.0
    %832 = vmatpush2.msra.mxu0 %v798
    %833 = vmatprep.subr.mxu0 0.0
    %834 = vmatpush2.msra.mxu0 %v797
    %835 = vmatprep.subr.mxu0 0.0
    %836 = vmatpush2.msra.mxu0 %v796
    %837 = vmatprep.subr.mxu0 0.0
    %838 = vmatpush2.msra.mxu0 %v795
    %839 = vmatprep.subr.mxu0 0.0
    %840 = vmatpush2.msra.mxu0 %v794
    %841 = vmatprep.subr.mxu0 0.0
    %842 = vmatpush2.msra.mxu0 %v793
    %843 = vmatprep.subr.mxu0 0.0
    %844 = vmatpush2.msra.mxu0 %v792
    %845 = vmatprep.subr.mxu0 0.0
    %846 = vmatpush2.msra.mxu0 %v791
    %847 = vmatprep.subr.mxu0 0.0
    %848 = vmatpush2.msra.mxu0 %v790
    %849 = vmatprep.subr.mxu0 0.0
    %850 = vmatpush2.msra.mxu0 %v789
    %851 = vmatprep.subr.mxu0 0.0
    %852 = vmatpush2.msra.mxu0 %v788
    %853 = vmatprep.subr.mxu0 0.0
    %854 = vmatpush2.msra.mxu0 %v787
    %855 = vmatprep.subr.mxu0 0.0
    %856 = vmatpush2.msra.mxu0 %v786
    %857 = vmatprep.subr.mxu0 0.0
    %858 = vmatpush2.msra.mxu0 %v785
    %859 = vmatprep.subr.mxu0 0.0
    %860 = vmatpush2.msra.mxu0 %v784
    %861 = vmatprep.subr.mxu0 0.0
    %862 = vmatpush2.msra.mxu0 %v783
    %863 = vmatprep.mubr.f32.mxu0 %v720
    %864 = vmatmul.mubr.f32.gmra.mxu0 %v719
    %v865 = vpop.f32.mrf.mxu0
    %v866 = vadd.f32 0.0, %v865
    %v867 = vpop.f32.mrf.mxu0
    %868 = vmatprep.mubr.f32.mxu0 %v722
    %869 = vmatmul.mubr.f32.gmra.mxu0 %v721
    %v870 = vpop.f32.mrf.mxu0
    %v871 = vadd.f32 0.0, %v870
    %v872 = vpop.f32.mrf.mxu0
    %873 = vmatprep.mubr.f32.mxu0 %v724
    %874 = vmatmul.mubr.f32.gmra.mxu0 %v723
    %v875 = vpop.f32.mrf.mxu0
    %v876 = vadd.f32 0.0, %v875
    %v877 = vpop.f32.mrf.mxu0
    %878 = vmatprep.mubr.f32.mxu0 %v726
    %879 = vmatmul.mubr.f32.gmra.mxu0 %v725
    %v880 = vpop.f32.mrf.mxu0
    %v881 = vadd.f32 0.0, %v880
    %v882 = vpop.f32.mrf.mxu0
    %883 = vmatprep.mubr.f32.mxu0 %v728
    %884 = vmatmul.mubr.f32.gmra.mxu0 %v727
    %v885 = vpop.f32.mrf.mxu0
    %v886 = vadd.f32 0.0, %v885
    %v887 = vpop.f32.mrf.mxu0
    %888 = vmatprep.mubr.f32.mxu0 %v730
    %889 = vmatmul.mubr.f32.gmra.mxu0 %v729
    %v890 = vpop.f32.mrf.mxu0
    %v891 = vadd.f32 0.0, %v890
    %v892 = vpop.f32.mrf.mxu0
    %893 = vmatprep.mubr.f32.mxu0 %v732
    %894 = vmatmul.mubr.f32.gmra.mxu0 %v731
    %v895 = vpop.f32.mrf.mxu0
    %v896 = vadd.f32 0.0, %v895
    %v897 = vpop.f32.mrf.mxu0
    %898 = vmatprep.mubr.f32.mxu0 %v734
    %899 = vmatmul.mubr.f32.gmra.mxu0 %v733
    %v900 = vpop.f32.mrf.mxu0
    %v901 = vadd.f32 0.0, %v900
    %v902 = vpop.f32.mrf.mxu0
    %903 = vmatprep.mubr.f32.mxu0 %v736
    %904 = vmatmul.mubr.f32.gmra.mxu0 %v735
    %v905 = vpop.f32.mrf.mxu0
    %v906 = vadd.f32 0.0, %v905
    %v907 = vpop.f32.mrf.mxu0
    %908 = vmatprep.mubr.f32.mxu0 %v738
    %909 = vmatmul.mubr.f32.gmra.mxu0 %v737
    %v910 = vpop.f32.mrf.mxu0
    %v911 = vadd.f32 0.0, %v910
    %v912 = vpop.f32.mrf.mxu0
    %913 = vmatprep.mubr.f32.mxu0 %v740
    %914 = vmatmul.mubr.f32.gmra.mxu0 %v739
    %v915 = vpop.f32.mrf.mxu0
    %v916 = vadd.f32 0.0, %v915
    %v917 = vpop.f32.mrf.mxu0
    %918 = vmatprep.mubr.f32.mxu0 %v742
    %919 = vmatmul.mubr.f32.gmra.mxu0 %v741
    %v920 = vpop.f32.mrf.mxu0
    %v921 = vadd.f32 0.0, %v920
    %v922 = vpop.f32.mrf.mxu0
    %923 = vmatprep.mubr.f32.mxu0 %v744
    %924 = vmatmul.mubr.f32.gmra.mxu0 %v743
    %v925 = vpop.f32.mrf.mxu0
    %v926 = vadd.f32 0.0, %v925
    %v927 = vpop.f32.mrf.mxu0
    %928 = vmatprep.mubr.f32.mxu0 %v746
    %929 = vmatmul.mubr.f32.gmra.mxu0 %v745
    %v930 = vpop.f32.mrf.mxu0
    %v931 = vadd.f32 0.0, %v930
    %v932 = vpop.f32.mrf.mxu0
    %933 = vmatprep.mubr.f32.mxu0 %v748
    %934 = vmatmul.mubr.f32.gmra.mxu0 %v747
    %v935 = vpop.f32.mrf.mxu0
    %v936 = vadd.f32 0.0, %v935
    %v937 = vpop.f32.mrf.mxu0
    %938 = vmatprep.mubr.f32.mxu0 %v750
    %939 = vmatmul.mubr.f32.gmra.mxu0 %v749
    %v940 = vpop.f32.mrf.mxu0
    %v941 = vadd.f32 0.0, %v940
    %v942 = vpop.f32.mrf.mxu0
    %943 = vdwg.mxu0
    %v944 = vadd.f32 %v751, %v866
    %v945 = vadd.f32 %v752, %v871
    %v946 = vadd.f32 %v753, %v876
    %v947 = vadd.f32 %v754, %v881
    %v948 = vadd.f32 %v755, %v886
    %v949 = vadd.f32 %v756, %v891
    %v950 = vadd.f32 %v757, %v896
    %v951 = vadd.f32 %v758, %v901
    %v952 = vadd.f32 %v759, %v906
    %v953 = vadd.f32 %v760, %v911
    %v954 = vadd.f32 %v761, %v916
    %v955 = vadd.f32 %v762, %v921
    %v956 = vadd.f32 %v763, %v926
    %v957 = vadd.f32 %v764, %v931
    %v958 = vadd.f32 %v765, %v936
    %v959 = vadd.f32 %v766, %v941
    %960 = vst [vmem:[#allocation2] sm:$0xff] %v944
    %961 = vst [vmem:[#allocation2 + $0x8] sm:$0xff] %v945
    %962 = vst [vmem:[#allocation2 + $0x10] sm:$0xff] %v946
    %963 = vst [vmem:[#allocation2 + $0x18] sm:$0xff] %v947
    %964 = vst [vmem:[#allocation2 + $0x20] sm:$0xff] %v948
    %965 = vst [vmem:[#allocation2 + $0x28] sm:$0xff] %v949
    %966 = vst [vmem:[#allocation2 + $0x30] sm:$0xff] %v950
    %967 = vst [vmem:[#allocation2 + $0x38] sm:$0xff] %v951
    %968 = vst [vmem:[#allocation2 + $0x40] sm:$0xff] %v952
    %969 = vst [vmem:[#allocation2 + $0x48] sm:$0xff] %v953
    %970 = vst [vmem:[#allocation2 + $0x50] sm:$0xff] %v954
    %971 = vst [vmem:[#allocation2 + $0x58] sm:$0xff] %v955
    %972 = vst [vmem:[#allocation2 + $0x60] sm:$0xff] %v956
    %973 = vst [vmem:[#allocation2 + $0x68] sm:$0xff] %v957
    %974 = vst [vmem:[#allocation2 + $0x70] sm:$0xff] %v958
    %975 = vst [vmem:[#allocation2 + $0x78] sm:$0xff] %v959
    // Predicated region
    $region38: #{swiglu.1} parent=1 // pred_check
      %p976 = pneg %p73
    $region39: #{swiglu.1} parent=1 // pred_check_branch
      %978 = sbr.rel (%p976) target = $region41
    $region40: #{swiglu.1} parent=1 // pred_region
      %v979 = vld [vmem:[#allocation2] sm:$0xff]
      %v980 = vld [vmem:[#allocation2 + $0x8] sm:$0xff]
      %v981 = vld [vmem:[#allocation2 + $0x10] sm:$0xff]
      %v982 = vld [vmem:[#allocation2 + $0x18] sm:$0xff]
      %v983 = vld [vmem:[#allocation2 + $0x20] sm:$0xff]
      %v984 = vld [vmem:[#allocation2 + $0x28] sm:$0xff]
      %v985 = vld [vmem:[#allocation2 + $0x30] sm:$0xff]
      %v986 = vld [vmem:[#allocation2 + $0x38] sm:$0xff]
      %v987 = vld [vmem:[#allocation2 + $0x40] sm:$0xff]
      %v988 = vld [vmem:[#allocation2 + $0x48] sm:$0xff]
      %v989 = vld [vmem:[#allocation2 + $0x50] sm:$0xff]
      %v990 = vld [vmem:[#allocation2 + $0x58] sm:$0xff]
      %v991 = vld [vmem:[#allocation2 + $0x60] sm:$0xff]
      %v992 = vld [vmem:[#allocation2 + $0x68] sm:$0xff]
      %v993 = vld [vmem:[#allocation2 + $0x70] sm:$0xff]
      %v994 = vld [vmem:[#allocation2 + $0x78] sm:$0xff]
      %995 = vst [vmem:[#allocation11] sm:$0xff] %v979
      %996 = vst [vmem:[#allocation11 + $0x8] sm:$0xff] %v980
      %997 = vst [vmem:[#allocation11 + $0x10] sm:$0xff] %v981
      %998 = vst [vmem:[#allocation11 + $0x18] sm:$0xff] %v982
      %999 = vst [vmem:[#allocation11 + $0x20] sm:$0xff] %v983
      %1000 = vst [vmem:[#allocation11 + $0x28] sm:$0xff] %v984
      %1001 = vst [vmem:[#allocation11 + $0x30] sm:$0xff] %v985
      %1002 = vst [vmem:[#allocation11 + $0x38] sm:$0xff] %v986
      %1003 = vst [vmem:[#allocation11 + $0x40] sm:$0xff] %v987
      %1004 = vst [vmem:[#allocation11 + $0x48] sm:$0xff] %v988
      %1005 = vst [vmem:[#allocation11 + $0x50] sm:$0xff] %v989
      %1006 = vst [vmem:[#allocation11 + $0x58] sm:$0xff] %v990
      %1007 = vst [vmem:[#allocation11 + $0x60] sm:$0xff] %v991
      %1008 = vst [vmem:[#allocation11 + $0x68] sm:$0xff] %v992
      %1009 = vst [vmem:[#allocation11 + $0x70] sm:$0xff] %v993
      %1010 = vst [vmem:[#allocation11 + $0x78] sm:$0xff] %v994
    $region41: #{swiglu.1} parent=1 // pred_fallthru
      _
    // Predicated region
    $region42: #{swiglu.1} parent=1 // pred_check
      _
    $region43: #{swiglu.1} parent=1 // pred_check_branch
      %1012 = sbr.rel (0) target = $region45
    $region44: #{swiglu.1} parent=1 // pred_region
      %s1014 = ssub.s32 2048, 2048
      %1015 = vsyncadd [#allocation5], %s1014
      %s1016 = sshll.u32 [#allocation11], 4
      %s1017 = int_to_ptr.vmem [resolvable:$true] %s1016
      %1022 = dma.vmem_to_hbm [thread:$0]  %s1017, 2048, %s4, [#allocation5], 128, 128, 8
    $region45: #{swiglu.1} parent=1 // pred_fallthru
      _
    // Predicated region
    $region46: #{swiglu.1} parent=1 // pred_check
      _
    $region47: #{swiglu.1} parent=1 // pred_check_branch
      %1024 = sbr.rel (0) target = $region49
    $region48: #{swiglu.1} parent=1 // pred_region
      %1025 = dma.done [#allocation5], 2048
    $region49: #{swiglu.1} parent=1 // pred_fallthru
      _
    %1026 = vsyncpa [#allocation4], 1
    %1027 = vsyncpa [#allocation7], 1
    %1028 = vsyncpa [#allocation10], 1
    %1029 = vsyncpa [#allocation5], 1

</llo_original>
